<compile_context>
chip_gen: v7x
topology: tpu7x:2x2x1
jax: 0.10.0
libtpu: 0.0.40
codegen_flags: <defaults>
</compile_context>

<pallas_src>
import jax
import jax.numpy as jnp
from jax.experimental import pallas as pl
from jax.experimental.pallas import tpu as pltpu


def cnn_encoder_kernel(xemb_ref, convw_ref, convb_ref, mask_ref, w2_ref, b2_ref,
                       out_ref):
    """Grid = (batch_tiles, num_layers); the layer axis is sequential ("arbitrary").

    xemb_ref:  (rows, E)     bf16  embedded tokens (resident per batch tile)
    convw_ref: (1, K*E, H)   bf16  this layer's conv weight, im2col form (streamed)
    convb_ref: (1, 1, H)     f32   this layer's conv bias (streamed)
    mask_ref:  (K, rows, 1)  bf16  conv-tap boundary masks (resident, layer-invariant)
    w2_ref:    (H//2, E)     bf16  hid2emb weight, transposed (resident)
    b2_ref:    (1, E)        f32   hid2emb bias (resident)
    out_ref:   (rows, E)     f32   activation carry == conved; acts as the
                                   accumulator across the layer axis and is
                                   written back to HBM once per batch tile.
    """
    rows, emb = out_ref.shape
    ksize = convw_ref.shape[1] // emb
    pad = (ksize - 1) // 2

    # Initialize the carried activation from the embeddings at the first layer.
    @pl.when(pl.program_id(1) == 0)
    def _init():
        out_ref[...] = xemb_ref[...].astype(jnp.float32)

    x = out_ref[...]                                     # (rows, E) f32 carry

    # ---- Conv1d(E -> H, K, padding=pad) as ONE im2col matmul ------------------
    # Column t holds x shifted by (t - pad) rows; taps that would cross a
    # sequence boundary inside the flattened (batch*seq) slab are zeroed by the
    # precomputed per-tap mask.  Shifts use pltpu.roll (XLU slot, otherwise
    # idle); each column is cast to bf16 before the concat so the (rows, K*E)
    # im2col slab is staged in bf16, never f32.
    # TODO(synk): if VMEM is tight on v7x, replace the concat with K
    #             accumulating jnp.dot calls to drop the xcol staging buffer.
    cols = []
    for t in range(ksize):                               # ksize is static
        s = t - pad
        if s == 0:
            cols.append(x.astype(jnp.bfloat16))
        else:
            shifted = pltpu.roll(x, shift=(-s) % rows, axis=0)   # XLU rotate
            cols.append(shifted.astype(jnp.bfloat16) * mask_ref[t])
    xcol = jnp.concatenate(cols, axis=1)                 # (rows, K*E) bf16

    acc = jnp.dot(xcol, convw_ref[0],
                  preferred_element_type=jnp.float32)    # (rows, H) f32
    acc = acc + convb_ref[0]                             # bias (1, H)

    # ---- GLU over channels (first half * sigmoid(second half)), f32 -----------
    half = acc.shape[1] // 2
    glu = acc[:, :half] * jax.nn.sigmoid(acc[:, half:])  # (rows, H//2)

    # ---- hid2emb Linear + residual; result is the next layer's carry ----------
    y = jnp.dot(glu.astype(jnp.bfloat16), w2_ref[...],
                preferred_element_type=jnp.float32)      # (rows, E)
    out_ref[...] = y + b2_ref[...] + x


def _pick_b_tile(B, L, target_rows=1024):
    """Batch-tile heuristic.

    * >= 2 batch tiles whenever B > 1 so the "parallel" grid axis can be sharded
      across the two v7x TensorCores (harmless on single-TC v5e/v6e).
    * rows = b_tile * L pushed toward the weight-streaming roofline
      (~256/1024/512 rows on v5e/v6e/v7x) but bounded for VMEM.
    * (b_tile * L) kept a multiple of 8 so the row merge stays sublane-aligned.
    """
    divisors = [d for d in range(1, B + 1) if B % d == 0]
    cands = [d for d in divisors if d < B and (d * L) % 8 == 0]
    if not cands:
        return B                     # single tile: block == full array, always legal
    fitting = [d for d in cands if d * L <= target_rows]
    return max(fitting) if fitting else min(cands)


def cnn_encoder_forward(inputs, emb_table, convw, convb, w2, b2, *, b_tile=None):
    """inputs: (B, L) int32 token ids.  Returns (conved, combined), each (B, emb_dim, L)."""
    B, L = inputs.shape
    num_layers, K, E, H = convw.shape
    assert H % 2 == 0 and K % 2 == 1
    pad = (K - 1) // 2

    if b_tile is None:
        b_tile = _pick_b_tile(B, L)
    assert B % b_tile == 0
    num_b_tiles = B // b_tile
    rows = b_tile * L

    # Embedding lookup (gather) as plain-JAX glue; bf16 activations halve the
    # HBM->VMEM DMA (the MXU accumulates in f32 inside the kernel).
    x_emb = emb_table[inputs].reshape(B * L, E).astype(jnp.bfloat16)   # (B*L, E)

    # Conv weights: tap-major (layers, K, E, H) -> im2col (layers, K*E, H), bf16.
    convw_im2col = convw.reshape(num_layers, K * E, H).astype(jnp.bfloat16)
    convb_r = convb.reshape(num_layers, 1, H).astype(jnp.float32)
    w2_bf = w2.astype(jnp.bfloat16)
    b2_f = jnp.asarray(b2, jnp.float32).reshape(1, E)

    # Layer-invariant per-tap boundary masks: zero conv taps that would cross a
    # sequence boundary after the flattened roll.  Shape (K, rows, 1), bf16.
    r = jnp.arange(rows, dtype=jnp.int32) % L
    taps = jnp.arange(K, dtype=jnp.int32) - pad
    pos = r[None, :] + taps[:, None]
    mask = ((pos >= 0) & (pos < L)).astype(jnp.bfloat16)[:, :, None]   # (K, rows, 1)

    # Explicit scoped-VMEM budget (defaults: 16 MiB v5e / 32 MiB v6e, v7x).
    est = (
        2 * rows * E * 2                       # xemb block (double-buffered, bf16)
        + 2 * rows * E * 4                     # out/carry block (double-buffered, f32)
        + 2 * (K * E * H * 2 + H * 4)          # streamed conv w/b (double-buffered)
        + K * rows * 2                         # tap mask (resident)
        + (H // 2) * E * 2 + E * 4             # hid2emb params (resident)
        + rows * K * E * 2                     # xcol staging (bf16)
        + rows * H * 4                         # conv accumulator (f32)
        + rows * (H // 2) * 4                  # glu (f32)
        + 2 * rows * E * 4                     # y / residual temps (f32)
    )
    vmem_limit = int(min(max(2 * est, 32 * 2 ** 20), 100 * 2 ** 20))

    cost = pl.CostEstimate(
        flops=num_layers * B * L * (2 * K * E * H + 2 * (H // 2) * E + (H // 2) + E),
        transcendentals=num_layers * B * L * (H // 2),
        bytes_accessed=(B * L * E * 2                                   # embeddings in
                        + num_b_tiles * num_layers * (K * E * H * 2 + H * 4)  # streamed W
                        + (H // 2) * E * 2 + E * 4 + K * rows * 2       # resident params
                        + B * L * E * 4),                               # conved out
    )

    conved_flat = pl.pallas_call(
        cnn_encoder_kernel,
        out_shape=jax.ShapeDtypeStruct((B * L, E), jnp.float32),
        grid_spec=pltpu.PrefetchScalarGridSpec(
            num_scalar_prefetch=0,
            grid=(num_b_tiles, num_layers),          # layer axis last (sequential)
            in_specs=[
                # embeddings: resident across the layer axis for each batch tile
                pl.BlockSpec((rows, E), lambda b, l: (b, 0)),
                # conv weight / bias: streamed one layer at a time (double-buffered)
                pl.BlockSpec((1, K * E, H), lambda b, l: (l, 0, 0)),
                pl.BlockSpec((1, 1, H), lambda b, l: (l, 0, 0)),
                # per-tap boundary mask: tiny, resident
                pl.BlockSpec((K, rows, 1), lambda b, l: (0, 0, 0)),
                # hid2emb weight / bias: small, resident
                pl.BlockSpec((H // 2, E), lambda b, l: (0, 0)),
                pl.BlockSpec((1, E), lambda b, l: (0, 0)),
            ],
            # out block doubles as the layer-to-layer activation carry
            out_specs=pl.BlockSpec((rows, E), lambda b, l: (b, 0)),
        ),
        compiler_params=pltpu.CompilerParams(
            dimension_semantics=("parallel", "arbitrary"),
            vmem_limit_bytes=vmem_limit),
        cost_estimate=cost,
    )(x_emb, convw_im2col, convb_r, mask, w2_bf, b2_f)

    # Restore PyTorch's NCL layout; after the loop conv_inp == conved, so
    # combined == 2 * conved — computed here instead of doubling kernel writeback.
    conved = conved_flat.reshape(B, L, E).transpose(0, 2, 1)
    combined = conved + conved
    return conved, combined


def reference_forward(inputs, emb_table, convw, convb, w2, b2):
    """Pure-JAX f32 reference mirroring the PyTorch forward (for verification)."""
    num_layers, K, E, H = convw.shape
    pad = (K - 1) // 2
    B, L = inputs.shape
    x = emb_table[inputs].astype(jnp.float32)                          # (B, L, E)
    for layer in range(num_layers):
        xp = jnp.pad(x, ((0, 0), (pad, pad), (0, 0)))
        acc = jnp.zeros((B, L, H), jnp.float32) + convb[layer]
        for t in range(K):
            acc = acc + jnp.einsum('ble,eh->blh', xp[:, t:t + L, :], convw[layer, t])
        glu = acc[..., :H // 2] * jax.nn.sigmoid(acc[..., H // 2:])
        y = jnp.einsum('blh,he->ble', glu, w2) + b2[0]
        x = y + x
    conved = x.transpose(0, 2, 1)
    return conved, conved + conved


if __name__ == "__main__":
    # Small shapes consistent with the module.
    B, L = 4, 8
    inp_dim = 20          # vocab size
    emb_dim = 16
    hid_dim = 32          # hid_dim/2 = 16
    num_layers = 2
    kernel_size = 3       # odd -> Conv1d is length-preserving (as the module assumes)

    key = jax.random.PRNGKey(0)
    k_emb, k_cw, k_cb, k_w2, k_b2, k_inp = jax.random.split(key, 6)

    # Deterministic synthetic parameters.
    emb_table = jax.random.normal(k_emb, (inp_dim, emb_dim), jnp.float32) * 0.1
    # Conv1d torch weight is (H, E, K); stored tap-major as (layers, K, E, H).
    convw = jax.random.normal(k_cw, (num_layers, kernel_size, emb_dim, hid_dim),
                              jnp.float32) * 0.1
    convb = jax.random.normal(k_cb, (num_layers, hid_dim), jnp.float32) * 0.1
    # hid2emb Linear: torch weight (E, H/2); stored transposed (H/2, E).
    w2 = jax.random.normal(k_w2, (hid_dim // 2, emb_dim), jnp.float32) * 0.1
    b2 = jax.random.normal(k_b2, (1, emb_dim), jnp.float32) * 0.1

    inputs = jax.random.randint(k_inp, (B, L), 0, inp_dim, dtype=jnp.int32)

    conved, combined = cnn_encoder_forward(
        inputs, emb_table, convw, convb, w2, b2)     # default picker -> 2 batch tiles
    jax.block_until_ready((conved, combined))

    ref_conved, ref_combined = reference_forward(
        inputs, emb_table, convw, convb, w2, b2)

    assert conved.shape == (B, emb_dim, L) and combined.shape == (B, emb_dim, L)
    # bf16 matmul operands (f32 accumulate) -> loosen tolerance vs the f32 reference.
    err_c = float(jnp.max(jnp.abs(conved - ref_conved)))
    err_m = float(jnp.max(jnp.abs(combined - ref_combined)))
    assert jnp.allclose(conved, ref_conved, atol=2e-2, rtol=2e-2), err_c
    assert jnp.allclose(combined, ref_combined, atol=2e-2, rtol=2e-2), err_m

    print("KERNEL_OK")
</pallas_src>

<mosaic_0001>
module attributes {stable_mosaic.version = 11 : i64} {
  func.func @cnn_encoder_kernel(%arg0: i32, %arg1: i32, %arg2: memref<16x16xbf16, #tpu.memory_space<vmem>>, %arg3: memref<1x48x32xbf16, #tpu.memory_space<vmem>>, %arg4: memref<1x1x32xf32, #tpu.memory_space<vmem>>, %arg5: memref<3x16x1xbf16, #tpu.memory_space<vmem>>, %arg6: memref<16x16xbf16, #tpu.memory_space<vmem>>, %arg7: memref<1x16xf32, #tpu.memory_space<vmem>>, %arg8: memref<16x16xf32, #tpu.memory_space<vmem>>) attributes {dimension_semantics = [#tpu.dimension_semantics<parallel>, #tpu.dimension_semantics<arbitrary>], iteration_bounds = array<i64: 2, 2>, scalar_prefetch = 0 : i64, scratch_operands = 0 : i64, tpu.core_type = #tpu.core_type<tc>, window_params = [{transform_indices = @transform_0, window_bounds = array<i64: 16, 16>}, {transform_indices = @transform_1, window_bounds = array<i64: 1, 48, 32>}, {transform_indices = @transform_2, window_bounds = array<i64: 1, 1, 32>}, {pipeline_mode = #tpu.pipeline_mode<synchronous>, transform_indices = @transform_3, window_bounds = array<i64: 3, 16, 1>}, {pipeline_mode = #tpu.pipeline_mode<synchronous>, transform_indices = @transform_4, window_bounds = array<i64: 16, 16>}, {pipeline_mode = #tpu.pipeline_mode<synchronous>, transform_indices = @transform_5, window_bounds = array<i64: 1, 16>}, {transform_indices = @transform_6, window_bounds = array<i64: 16, 16>}]} {
    %c0_i32 = arith.constant 0 : i32
    %0 = arith.cmpi eq, %arg1, %c0_i32 : i32
    %1 = arith.extui %0 : i1 to i32
    %c0_i32_0 = arith.constant 0 : i32
    %2 = arith.cmpi ne, %1, %c0_i32_0 : i32
    scf.if %2 {
      %c0_21 = arith.constant 0 : index
      %c0_22 = arith.constant 0 : index
      %41 = vector.load %arg2[%c0_21, %c0_22] : memref<16x16xbf16, #tpu.memory_space<vmem>>, vector<16x16xbf16>
      %42 = arith.extf %41 : vector<16x16xbf16> to vector<16x16xf32>
      %c0_23 = arith.constant 0 : index
      %c0_24 = arith.constant 0 : index
      %43 = vector.load %arg8[%c0_23, %c0_24] : memref<16x16xf32, #tpu.memory_space<vmem>>, vector<16x16xf32>
      tpu.vector_store %arg8[%c0_23, %c0_24], %42 {strides = array<i32>} : memref<16x16xf32, #tpu.memory_space<vmem>>, vector<16x16xf32>,
    } else {
    }
    %c0 = arith.constant 0 : index
    %c0_1 = arith.constant 0 : index
    %3 = vector.load %arg8[%c0, %c0_1] : memref<16x16xf32, #tpu.memory_space<vmem>>, vector<16x16xf32>
    %c1_i32 = arith.constant 1 : i32
    %4 = tpu.dynamic_rotate %3 by %c1_i32 dim 0 : vector<16x16xf32>, i32 -> vector<16x16xf32>
    %5 = arith.truncf %4 : vector<16x16xf32> to vector<16x16xbf16>
    %c0_2 = arith.constant 0 : index
    %c0_3 = arith.constant 0 : index
    %c0_4 = arith.constant 0 : index
    %6 = vector.load %arg5[%c0_2, %c0_3, %c0_4] : memref<3x16x1xbf16, #tpu.memory_space<vmem>>, vector<1x16x1xbf16>
    %7 = vector.shape_cast %6 : vector<1x16x1xbf16> to vector<16x1xbf16>
    %8 = vector.broadcast %7 : vector<16x1xbf16> to vector<16x16xbf16>
    %9 = arith.mulf %5, %8 : vector<16x16xbf16>
    %10 = arith.truncf %3 : vector<16x16xf32> to vector<16x16xbf16>
    %c15_i32 = arith.constant 15 : i32
    %11 = tpu.dynamic_rotate %3 by %c15_i32 dim 0 : vector<16x16xf32>, i32 -> vector<16x16xf32>
    %12 = arith.truncf %11 : vector<16x16xf32> to vector<16x16xbf16>
    %c2 = arith.constant 2 : index
    %c0_5 = arith.constant 0 : index
    %c0_6 = arith.constant 0 : index
    %13 = vector.load %arg5[%c2, %c0_5, %c0_6] : memref<3x16x1xbf16, #tpu.memory_space<vmem>>, vector<1x16x1xbf16>
    %14 = vector.shape_cast %13 : vector<1x16x1xbf16> to vector<16x1xbf16>
    %15 = vector.broadcast %14 : vector<16x1xbf16> to vector<16x16xbf16>
    %16 = arith.mulf %12, %15 : vector<16x16xbf16>
    %17 = tpu.concatenate %9, %10, %16 in 1 : vector<16x16xbf16>, vector<16x16xbf16>, vector<16x16xbf16> -> vector<16x48xbf16>
    %c0_7 = arith.constant 0 : index
    %c0_8 = arith.constant 0 : index
    %c0_9 = arith.constant 0 : index
    %18 = vector.load %arg3[%c0_7, %c0_8, %c0_9] : memref<1x48x32xbf16, #tpu.memory_space<vmem>>, vector<1x48x32xbf16>
    %19 = vector.shape_cast %18 : vector<1x48x32xbf16> to vector<48x32xbf16>
    %cst = arith.constant dense<0.000000e+00> : vector<16x32xf32>
    %20 = tpu.matmul %17, %19, %cst {dimension_numbers = #tpu.dot_dimension_numbers<[1], [0], [0], [1], [0, 0, 1, 1], [], []>} : vector<16x48xbf16>, vector<48x32xbf16>, vector<16x32xf32> -> vector<16x32xf32>
    %c0_10 = arith.constant 0 : index
    %c0_11 = arith.constant 0 : index
    %c0_12 = arith.constant 0 : index
    %21 = vector.load %arg4[%c0_10, %c0_11, %c0_12] : memref<1x1x32xf32, #tpu.memory_space<vmem>>, vector<1x1x32xf32>
    %22 = vector.shape_cast %21 : vector<1x1x32xf32> to vector<1x32xf32>
    %23 = vector.broadcast %22 : vector<1x32xf32> to vector<16x32xf32>
    %24 = arith.addf %20, %23 : vector<16x32xf32>
    %25 = vector.extract_strided_slice %24 {offsets = [0, 0], sizes = [16, 16], strides = [1, 1]} : vector<16x32xf32> to vector<16x16xf32>
    %26 = vector.extract_strided_slice %24 {offsets = [0, 16], sizes = [16, 16], strides = [1, 1]} : vector<16x32xf32> to vector<16x16xf32>
    %27 = arith.negf %26 : vector<16x16xf32>
    %28 = math.exp %27 : vector<16x16xf32>
    %cst_13 = arith.constant 1.000000e+00 : f32
    %29 = vector.broadcast %cst_13 : f32 to vector<16x16xf32>
    %30 = arith.addf %29, %28 : vector<16x16xf32>
    %31 = arith.divf %29, %30 : vector<16x16xf32>
    %32 = arith.mulf %25, %31 : vector<16x16xf32>
    %33 = arith.truncf %32 : vector<16x16xf32> to vector<16x16xbf16>
    %c0_14 = arith.constant 0 : index
    %c0_15 = arith.constant 0 : index
    %34 = vector.load %arg6[%c0_14, %c0_15] : memref<16x16xbf16, #tpu.memory_space<vmem>>, vector<16x16xbf16>
    %cst_16 = arith.constant dense<0.000000e+00> : vector<16x16xf32>
    %35 = tpu.matmul %33, %34, %cst_16 {dimension_numbers = #tpu.dot_dimension_numbers<[1], [0], [0], [1], [0, 0, 1, 1], [], []>} : vector<16x16xbf16>, vector<16x16xbf16>, vector<16x16xf32> -> vector<16x16xf32>
    %c0_17 = arith.constant 0 : index
    %c0_18 = arith.constant 0 : index
    %36 = vector.load %arg7[%c0_17, %c0_18] : memref<1x16xf32, #tpu.memory_space<vmem>>, vector<1x16xf32>
    %37 = vector.broadcast %36 : vector<1x16xf32> to vector<16x16xf32>
    %38 = arith.addf %35, %37 : vector<16x16xf32>
    %39 = arith.addf %38, %3 : vector<16x16xf32>
    %c0_19 = arith.constant 0 : index
    %c0_20 = arith.constant 0 : index
    %40 = vector.load %arg8[%c0_19, %c0_20] : memref<16x16xf32, #tpu.memory_space<vmem>>, vector<16x16xf32>
    tpu.vector_store %arg8[%c0_19, %c0_20], %39 {strides = array<i32>} : memref<16x16xf32, #tpu.memory_space<vmem>>, vector<16x16xf32>,
    return
  }
  func.func @transform_0(%arg0: i32, %arg1: i32) -> (i32, i32) {
    %c0_i32 = arith.constant 0 : i32
    %c0_i32_0 = arith.constant 0 : i32
    return %arg0, %c0_i32 : i32, i32
  }
  func.func @transform_1(%arg0: i32, %arg1: i32) -> (i32, i32, i32) {
    %c0_i32 = arith.constant 0 : i32
    %c0_i32_0 = arith.constant 0 : i32
    %c0_i32_1 = arith.constant 0 : i32
    return %arg1, %c0_i32, %c0_i32_0 : i32, i32, i32
  }
  func.func @transform_2(%arg0: i32, %arg1: i32) -> (i32, i32, i32) {
    %c0_i32 = arith.constant 0 : i32
    %c0_i32_0 = arith.constant 0 : i32
    %c0_i32_1 = arith.constant 0 : i32
    return %arg1, %c0_i32, %c0_i32_0 : i32, i32, i32
  }
  func.func @transform_3(%arg0: i32, %arg1: i32) -> (i32, i32, i32) {
    %c0_i32 = arith.constant 0 : i32
    %c0_i32_0 = arith.constant 0 : i32
    %c0_i32_1 = arith.constant 0 : i32
    %c0_i32_2 = arith.constant 0 : i32
    return %c0_i32, %c0_i32_0, %c0_i32_1 : i32, i32, i32
  }
  func.func @transform_4(%arg0: i32, %arg1: i32) -> (i32, i32) {
    %c0_i32 = arith.constant 0 : i32
    %c0_i32_0 = arith.constant 0 : i32
    %c0_i32_1 = arith.constant 0 : i32
    return %c0_i32, %c0_i32_0 : i32, i32
  }
  func.func @transform_5(%arg0: i32, %arg1: i32) -> (i32, i32) {
    %c0_i32 = arith.constant 0 : i32
    %c0_i32_0 = arith.constant 0 : i32
    %c0_i32_1 = arith.constant 0 : i32
    return %c0_i32, %c0_i32_0 : i32, i32
  }
  func.func @transform_6(%arg0: i32, %arg1: i32) -> (i32, i32) {
    %c0_i32 = arith.constant 0 : i32
    %c0_i32_0 = arith.constant 0 : i32
    return %arg0, %c0_i32 : i32, i32
  }
}

</mosaic_0001>

<llo_original>
// kernel: tpu_custom_call.1
$region0: #{tpu_custom_call.1}
  #allocation0 [shape = 'u32[]', space=smem, size = 0x4, offset = 0x4, fixed_abs, tag = 'smem constant byte address 0x4 - core index']
  #allocation1 [shape = 'u32[144,128]{1,0:T(1,128)}', space=vmem, size = 0x12000, scoped, tag = 'internal scratch']
  %s0 = inlined_call_operand.vmem [shape: bf16[32,16], index: 0, kind: input, shape index: {}]
  %s1 = inlined_call_operand.vmem [shape: bf16[2,48,32], index: 1, kind: input, shape index: {}]
  %s2 = inlined_call_operand.vmem [shape: f32[2,1,32], index: 2, kind: input, shape index: {}]
  %s3 = inlined_call_operand.vmem [shape: bf16[3,16,1], index: 3, kind: input, shape index: {}]
  %s4 = inlined_call_operand.vmem [shape: bf16[16,16], index: 4, kind: input, shape index: {}]
  %s5 = inlined_call_operand.vmem [shape: f32[1,16], index: 5, kind: input, shape index: {}]
  %s6 = inlined_call_operand.vmem [shape: f32[32,16], index: 6, kind: output, shape index: {}]
  %s7 = sld [smem:[#allocation0]]
  $region61: #{tpu_custom_call.1} parent=0
    _
  %s9 = ssub.s32 1, %s7
  %s10 = scalar_select 0, %s9, %s7
  loop: start=0, step=1, limit=6
  $region2: #{tpu_custom_call.1} parent=0 // loop_pre_header
    _
  $region3: #{tpu_custom_call.1} parent=0 // loop_header
    %s12 = sphi 0, %s16
    %p13 = scmp.ge.s32.totalorder %s12, 6
    %s19 = sphi 0, %s31
    %s20 = sphi 0, %s27
    %s21 = sphi 0, %s19
    %s22 = sphi 0, %s20
    %s23 = sphi 0, %s21
    %s24 = sphi 0, %s22
    %s34 = sphi 0, %s36
    %s37 = sphi 0, %s34
    %s38 = sphi 0, %s37
    %s54 = sphi 0, %s38
    %s60 = sphi 0, %s62
    %s63 = sphi 0, %s60
    %s64 = sphi 0, %s63
    %s80 = sphi 0, %s64
    %s86 = sphi 0, %s88
    %s89 = sphi 0, %s86
    %s90 = sphi 0, %s89
    %s106 = sphi 0, %s90
    %s110 = sphi 0, %s110
    %s112 = sphi 0, %s110
    %s113 = sphi 0, %s112
    %s127 = sphi 0, %s113
    %s131 = sphi 0, %s131
    %s133 = sphi 0, %s131
    %s134 = sphi 0, %s133
    %s148 = sphi 0, %s134
    %s152 = sphi 0, %s152
    %s154 = sphi 0, %s152
    %s155 = sphi 0, %s154
    %s169 = sphi 0, %s155
    %s175 = sphi 0, %s177
    %s178 = sphi 0, %s175
    %s179 = sphi 0, %s178
    %s195 = sphi 0, %s179
  $region4: #{tpu_custom_call.1} parent=0 // loop_header_branch
    %15 = sbr.rel (%p13) target = $region8
  $region5: #{tpu_custom_call.1} parent=0 // loop_body
    %s17 = ssub.s32 %s12, 1
    %s18 = ssub.s32 %s12, 2
    %s25 = sadd.s32 1, %s20
    %p26 = scmp.ge.s32.totalorder %s25, 2
    %s27 = scalar_select %p26, 0, %s25
    %s28 = sadd.s32 1, %s19
    %s29 = scalar_select %p26, %s28, %s19
    %p30 = scmp.ge.s32.totalorder %s29, 2
    %s31 = scalar_select %p30, 0, %s29
    %s32 = ssub.s32 %s19, %s31
    %p33 = scmp.eq.s32.totalorder %s32, 0
    %s35 = sadd.s32 %s34, 1
    %s36 = scalar_select %p33, %s34, %s35
    %p39 = pneg %p33
    %p40 = scmp.eq.s32.totalorder %s12, 3
    %p41 = por %p39, %p40
    %p42 = scmp.ne.s32.totalorder %s34, %s37
    %p43 = scmp.eq.s32.totalorder %s12, 0
    %p44 = por %p42, %p43
    %p45 = scmp.ne.s32.totalorder %s34, %s37
    %p46 = scmp.eq.s32.totalorder %s17, 3
    %p47 = por %p45, %p46
    %p48 = scmp.ne.s32.totalorder %s37, %s38
    %p49 = scmp.eq.s32.totalorder %s17, 0
    %p50 = por %p48, %p49
    %p51 = scmp.ne.s32.totalorder %s37, %s38
    %p52 = scmp.eq.s32.totalorder %s18, 3
    %p53 = por %p51, %p52
    %p55 = scmp.ne.s32.totalorder %s38, %s54
    %p56 = scmp.eq.s32.totalorder %s18, 0
    %p57 = por %p55, %p56
    %s58 = ssub.s32 %s20, %s27
    %p59 = scmp.eq.s32.totalorder %s58, 0
    %s61 = sadd.s32 %s60, 1
    %s62 = scalar_select %p59, %s60, %s61
    %p65 = pneg %p59
    %p66 = scmp.eq.s32.totalorder %s12, 3
    %p67 = por %p65, %p66
    %p68 = scmp.ne.s32.totalorder %s60, %s63
    %p69 = scmp.eq.s32.totalorder %s12, 0
    %p70 = por %p68, %p69
    %p71 = scmp.ne.s32.totalorder %s60, %s63
    %p72 = scmp.eq.s32.totalorder %s17, 3
    %p73 = por %p71, %p72
    %p74 = scmp.ne.s32.totalorder %s63, %s64
    %p75 = scmp.eq.s32.totalorder %s17, 0
    %p76 = por %p74, %p75
    %p77 = scmp.ne.s32.totalorder %s63, %s64
    %p78 = scmp.eq.s32.totalorder %s18, 3
    %p79 = por %p77, %p78
    %p81 = scmp.ne.s32.totalorder %s64, %s80
    %p82 = scmp.eq.s32.totalorder %s18, 0
    %p83 = por %p81, %p82
    %s84 = ssub.s32 %s20, %s27
    %p85 = scmp.eq.s32.totalorder %s84, 0
    %s87 = sadd.s32 %s86, 1
    %s88 = scalar_select %p85, %s86, %s87
    %p91 = pneg %p85
    %p92 = scmp.eq.s32.totalorder %s12, 3
    %p93 = por %p91, %p92
    %p94 = scmp.ne.s32.totalorder %s86, %s89
    %p95 = scmp.eq.s32.totalorder %s12, 0
    %p96 = por %p94, %p95
    %p97 = scmp.ne.s32.totalorder %s86, %s89
    %p98 = scmp.eq.s32.totalorder %s17, 3
    %p99 = por %p97, %p98
    %p100 = scmp.ne.s32.totalorder %s89, %s90
    %p101 = scmp.eq.s32.totalorder %s17, 0
    %p102 = por %p100, %p101
    %p103 = scmp.ne.s32.totalorder %s89, %s90
    %p104 = scmp.eq.s32.totalorder %s18, 3
    %p105 = por %p103, %p104
    %p107 = scmp.ne.s32.totalorder %s90, %s106
    %p108 = scmp.eq.s32.totalorder %s18, 0
    %p109 = por %p107, %p108
    %s111 = sadd.s32 %s110, 1
    %p114 = scmp.eq.s32.totalorder %s12, 3
    %p115 = scmp.ne.s32.totalorder %s110, %s112
    %p116 = scmp.eq.s32.totalorder %s12, 0
    %p117 = por %p115, %p116
    %p118 = scmp.ne.s32.totalorder %s110, %s112
    %p119 = scmp.eq.s32.totalorder %s17, 3
    %p120 = por %p118, %p119
    %p121 = scmp.ne.s32.totalorder %s112, %s113
    %p122 = scmp.eq.s32.totalorder %s17, 0
    %p123 = por %p121, %p122
    %p124 = scmp.ne.s32.totalorder %s112, %s113
    %p125 = scmp.eq.s32.totalorder %s18, 3
    %p126 = por %p124, %p125
    %p128 = scmp.ne.s32.totalorder %s113, %s127
    %p129 = scmp.eq.s32.totalorder %s18, 0
    %p130 = por %p128, %p129
    %s132 = sadd.s32 %s131, 1
    %p135 = scmp.eq.s32.totalorder %s12, 3
    %p136 = scmp.ne.s32.totalorder %s131, %s133
    %p137 = scmp.eq.s32.totalorder %s12, 0
    %p138 = por %p136, %p137
    %p139 = scmp.ne.s32.totalorder %s131, %s133
    %p140 = scmp.eq.s32.totalorder %s17, 3
    %p141 = por %p139, %p140
    %p142 = scmp.ne.s32.totalorder %s133, %s134
    %p143 = scmp.eq.s32.totalorder %s17, 0
    %p144 = por %p142, %p143
    %p145 = scmp.ne.s32.totalorder %s133, %s134
    %p146 = scmp.eq.s32.totalorder %s18, 3
    %p147 = por %p145, %p146
    %p149 = scmp.ne.s32.totalorder %s134, %s148
    %p150 = scmp.eq.s32.totalorder %s18, 0
    %p151 = por %p149, %p150
    %s153 = sadd.s32 %s152, 1
    %p156 = scmp.eq.s32.totalorder %s12, 3
    %p157 = scmp.ne.s32.totalorder %s152, %s154
    %p158 = scmp.eq.s32.totalorder %s12, 0
    %p159 = por %p157, %p158
    %p160 = scmp.ne.s32.totalorder %s152, %s154
    %p161 = scmp.eq.s32.totalorder %s17, 3
    %p162 = por %p160, %p161
    %p163 = scmp.ne.s32.totalorder %s154, %s155
    %p164 = scmp.eq.s32.totalorder %s17, 0
    %p165 = por %p163, %p164
    %p166 = scmp.ne.s32.totalorder %s154, %s155
    %p167 = scmp.eq.s32.totalorder %s18, 3
    %p168 = por %p166, %p167
    %p170 = scmp.ne.s32.totalorder %s155, %s169
    %p171 = scmp.eq.s32.totalorder %s18, 0
    %p172 = por %p170, %p171
    %s173 = ssub.s32 %s19, %s31
    %p174 = scmp.eq.s32.totalorder %s173, 0
    %s176 = sadd.s32 %s175, 1
    %s177 = scalar_select %p174, %s175, %s176
    %p180 = pneg %p174
    %p181 = scmp.eq.s32.totalorder %s12, 3
    %p182 = por %p180, %p181
    %p183 = scmp.ne.s32.totalorder %s175, %s178
    %p184 = scmp.eq.s32.totalorder %s12, 0
    %p185 = por %p183, %p184
    %p186 = scmp.ne.s32.totalorder %s175, %s178
    %p187 = scmp.eq.s32.totalorder %s17, 3
    %p188 = por %p186, %p187
    %p189 = scmp.ne.s32.totalorder %s178, %s179
    %p190 = scmp.eq.s32.totalorder %s17, 0
    %p191 = por %p189, %p190
    %p192 = scmp.ne.s32.totalorder %s178, %s179
    %p193 = scmp.eq.s32.totalorder %s18, 3
    %p194 = por %p192, %p193
    %p196 = scmp.ne.s32.totalorder %s179, %s195
    %p197 = scmp.eq.s32.totalorder %s18, 0
    %p198 = por %p196, %p197
    %p199 = scmp.le.s32.totalorder 1, %s12
    %p200 = scmp.lt.s32.totalorder %s12, 5
    %p201 = pnand %p199, %p200
    %p202 = pneg %p201
    // Predicated region
    $region9: #{tpu_custom_call.1} parent=5 // pred_check
      _
    $region10: #{tpu_custom_call.1} parent=5 // pred_check_branch
      %204 = sbr.rel (%p201) target = $region12
    $region11: #{tpu_custom_call.1} parent=5 // pred_region
      %s205 = ssub.s32 %s12, 1
      // Predicated region
      $region13: #{tpu_custom_call.1} parent=11 // pred_check
        %p206 = pneg %p123
      $region14: #{tpu_custom_call.1} parent=11 // pred_check_branch
        %208 = sbr.rel (%p206) target = $region16
      $region15: #{tpu_custom_call.1} parent=11 // pred_region
        _
      $region16: #{tpu_custom_call.1} parent=11 // pred_fallthru
        _
      // Predicated region
      $region17: #{tpu_custom_call.1} parent=11 // pred_check
        %p209 = pneg %p144
      $region18: #{tpu_custom_call.1} parent=11 // pred_check_branch
        %211 = sbr.rel (%p209) target = $region20
      $region19: #{tpu_custom_call.1} parent=11 // pred_region
        _
      $region20: #{tpu_custom_call.1} parent=11 // pred_fallthru
        _
      // Predicated region
      $region21: #{tpu_custom_call.1} parent=11 // pred_check
        %p212 = pneg %p165
      $region22: #{tpu_custom_call.1} parent=11 // pred_check_branch
        %214 = sbr.rel (%p212) target = $region24
      $region23: #{tpu_custom_call.1} parent=11 // pred_region
        _
      $region24: #{tpu_custom_call.1} parent=11 // pred_fallthru
        _
    $region12: #{tpu_custom_call.1} parent=5 // pred_fallthru
      _
    %p215 = scmp.lt.s32.totalorder %s12, 4
    // Predicated region
    $region25: #{tpu_custom_call.1} parent=5 // pred_check
      %p216 = pneg %p215
    $region26: #{tpu_custom_call.1} parent=5 // pred_check_branch
      %218 = sbr.rel (%p216) target = $region28
    $region27: #{tpu_custom_call.1} parent=5 // pred_region
      // Predicated region
      $region29: #{tpu_custom_call.1} parent=27 // pred_check
        %p219 = pneg %p44
      $region30: #{tpu_custom_call.1} parent=27 // pred_check_branch
        %221 = sbr.rel (%p219) target = $region32
      $region31: #{tpu_custom_call.1} parent=27 // pred_region
        %s222 = smul.u32 2, %s19
        %p223 = scmp.lt.s32.totalorder %s222, 3
        %s224 = scalar_select %p223, %s222, 3
        %s225 = smul.addr %s224, 4
        %s226 = scalar_lea.vmem %s0, %s225
        %s227 = smul.u32 2, %s19
      $region32: #{tpu_custom_call.1} parent=27 // pred_fallthru
        _
      // Predicated region
      $region33: #{tpu_custom_call.1} parent=27 // pred_check
        %p228 = pneg %p70
      $region34: #{tpu_custom_call.1} parent=27 // pred_check_branch
        %230 = sbr.rel (%p228) target = $region36
      $region35: #{tpu_custom_call.1} parent=27 // pred_region
        %p231 = scmp.lt.s32.totalorder %s20, 1
        %s232 = scalar_select %p231, %s20, 1
        %s233 = smul.addr %s232, 6
        %s234 = smul.addr %s233, 4
        %s235 = scalar_lea.vmem %s1, %s234
      $region36: #{tpu_custom_call.1} parent=27 // pred_fallthru
        _
      // Predicated region
      $region37: #{tpu_custom_call.1} parent=27 // pred_check
        %p236 = pneg %p96
      $region38: #{tpu_custom_call.1} parent=27 // pred_check_branch
        %238 = sbr.rel (%p236) target = $region40
      $region39: #{tpu_custom_call.1} parent=27 // pred_region
        %p239 = scmp.lt.s32.totalorder %s20, 1
        %s240 = scalar_select %p239, %s20, 1
        %s241 = scalar_lea.vmem %s2, %s240
      $region40: #{tpu_custom_call.1} parent=27 // pred_fallthru
        _
    $region28: #{tpu_custom_call.1} parent=5 // pred_fallthru
      _
    %p242 = scmp.le.s32.totalorder 1, %s12
    %p243 = scmp.lt.s32.totalorder %s12, 5
    %p244 = pnand %p242, %p243
    %p245 = pneg %p244
    // Predicated region
    $region41: #{tpu_custom_call.1} parent=5 // pred_check
      _
    $region42: #{tpu_custom_call.1} parent=5 // pred_check_branch
      %247 = sbr.rel (%p244) target = $region44
    $region43: #{tpu_custom_call.1} parent=5 // pred_region
      %s248 = ssub.s32 %s12, 1
      %s249 = smul.u32 2, %s21
      %p250 = scmp.lt.s32.totalorder %s249, 3
      %s251 = scalar_select %p250, %s249, 3
      %s252 = smul.addr %s251, 4
      %s253 = scalar_lea.vmem %s0, %s252
      %p254 = pneg %p50
      %p255 = pneg %p47
      %p256 = scmp.lt.s32.totalorder %s22, 1
      %s257 = scalar_select %p256, %s22, 1
      %s258 = smul.addr %s257, 6
      %s259 = smul.addr %s258, 4
      %s260 = scalar_lea.vmem %s1, %s259
      %p261 = pneg %p76
      %p262 = pneg %p73
      %p263 = scmp.lt.s32.totalorder %s22, 1
      %s264 = scalar_select %p263, %s22, 1
      %s265 = scalar_lea.vmem %s2, %s264
      %p266 = pneg %p102
      %p267 = pneg %p99
      %p268 = pneg %p123
      %p269 = pneg %p120
      %p270 = pneg %p144
      %p271 = pneg %p141
      %p272 = pneg %p165
      %p273 = pneg %p162
      %p274 = pneg %p191
      %p275 = pneg %p188
      %s276 = smul.u32 2, %s21
      %p277 = scmp.lt.s32.totalorder %s276, 3
      %s278 = scalar_select %p277, %s276, 3
      %s279 = smul.addr %s278, 8
      %s280 = scalar_lea.vmem %s6, %s279
      %s281 = smul.u32 2, %s21
      %p282 = scmp.lt.s32.totalorder %s281, 3
      %s283 = scalar_select %p282, %s281, 3
      %s284 = smul.addr %s283, 4
      %s285 = scalar_lea.vmem %s0, %s284
      %s286 = smul.u32 2, %s21
      %p287 = scmp.lt.s32.totalorder %s22, 1
      %s288 = scalar_select %p287, %s22, 1
      %s289 = smul.addr %s288, 6
      %s290 = smul.addr %s289, 4
      %s291 = scalar_lea.vmem %s1, %s290
      %p292 = scmp.lt.s32.totalorder %s22, 1
      %s293 = scalar_select %p292, %s22, 1
      %s294 = scalar_lea.vmem %s2, %s293
      %s295 = smul.u32 2, %s21
      %p296 = scmp.lt.s32.totalorder %s295, 3
      %s297 = scalar_select %p296, %s295, 3
      %s298 = smul.addr %s297, 8
      %s299 = scalar_lea.vmem %s6, %s298
      %s300 = smul.u32 2, %s21
      %p302 = scmp.eq.s32.totalorder %s22, 0
      // Predicated region
      $region45: #{tpu_custom_call.1} parent=43 // pred_check
        %p303 = pneg %p302
      $region46: #{tpu_custom_call.1} parent=43 // pred_check_branch
        %305 = sbr.rel (%p303) target = $region48
      $region47: #{tpu_custom_call.1} parent=43 // pred_region
        %v306 = vld [vmem:[%s285] sm:$0xf]
        %v307 = vld [vmem:[%s285 + $0x4] sm:$0xf]
        %v308 = vunpack.c.l.bf16 %v306
        %v309 = vunpack.c.l.bf16 %v307
        %vm310 = vcmask 130048
        %311 = vst.msk [vmem:[%s299] sm:$0xff] %vm310, %v308
        %312 = vst.msk [vmem:[%s299 + $0x8] sm:$0xff] %vm310, %v309
      $region48: #{tpu_custom_call.1} parent=43 // pred_fallthru
        _
      %v313 = vld [vmem:[%s299] sm:$0xff]
      %v314 = vld [vmem:[%s299 + $0x8] sm:$0xff]
      %v315 = vrot.slane %v313, 7
      %v316 = vrot.slane %v314, 7
      %v317 = vlaneseq
      %v318 = vshrl.u32 %v317, 7
      %vm319 = vcmp.lt.s32.totalorder %v318, 1
      %v320 = vsel %vm319, %v315, %v316
      %v321 = vsel %vm319, %v316, %v315
      %v322 = vpack.c.bf16 %v320, %v321
      %v323 = vld [vmem:[%s3] sm:$0xf]
      %v324 = vld [vmem:[%s3 + $0x4] sm:$0xf]
      %326 = vset.pattern.permute.xlu0 0
      %327 = vperm.xlu0 %326, %v323
      %v328 = vpop.permute.xlu0 %327
      %v331 = vunpack.c.l.s4 839922192
      %v332 = vunpack.c.0.s8 %v331
      %v333 = vlaneseq
      %v334 = vshrl.u32 %v333, 7
      %v335 = vsub.s32 %v332, %v334
      %v336 = vrot.slane %v328, %v335
      %338 = vset.pattern.permute.xlu0 0
      %339 = vperm.xlu0 %338, %v324
      %v340 = vpop.permute.xlu0 %339
      %v343 = vunpack.c.l.s4 839922192
      %v344 = vunpack.c.0.s8 %v343
      %v345 = vlaneseq
      %v346 = vshrl.u32 %v345, 7
      %v347 = vsub.s32 %v344, %v346
      %v348 = vrot.slane %v340, %v347
      %v351 = vunpack.c.l.b16 %v336
      %v352 = vunpack.c.l.b16 %v348
      %v353 = vpack.c.b16 %v352, %v351
      %v355 = vmul.bf16 %v322, %v353
      %v356 = vpack.c.bf16 %v314, %v313
      %v357 = vrot.slane %v313, 1
      %v358 = vrot.slane %v314, 1
      %vm359 = vcmp.lt.s32.totalorder %v318, 7
      %v360 = vsel %vm359, %v357, %v358
      %v361 = vsel %vm359, %v358, %v357
      %v362 = vpack.c.bf16 %v361, %v360
      %s363 = scalar_lea.vmem %s3, 16
      %v364 = vld [vmem:[%s363] sm:$0xf]
      %v365 = vld [vmem:[%s363 + $0x4] sm:$0xf]
      %367 = vset.pattern.permute.xlu0 0
      %368 = vperm.xlu0 %367, %v364
      %v369 = vpop.permute.xlu0 %368
      %v372 = vunpack.c.l.s4 839922192
      %v373 = vunpack.c.0.s8 %v372
      %v374 = vlaneseq
      %v375 = vshrl.u32 %v374, 7
      %v376 = vsub.s32 %v373, %v375
      %v377 = vrot.slane %v369, %v376
      %379 = vset.pattern.permute.xlu0 0
      %380 = vperm.xlu0 %379, %v365
      %v381 = vpop.permute.xlu0 %380
      %v384 = vunpack.c.l.s4 839922192
      %v385 = vunpack.c.0.s8 %v384
      %v386 = vlaneseq
      %v387 = vshrl.u32 %v386, 7
      %v388 = vsub.s32 %v385, %v387
      %v389 = vrot.slane %v381, %v388
      %v392 = vunpack.c.l.b16 %v377
      %v393 = vunpack.c.l.b16 %v389
      %v394 = vpack.c.b16 %v393, %v392
      %v396 = vmul.bf16 %v362, %v394
      %398 = vrot.lane.b32.xlu0 %v356, 16
      %v399 = vpop.permute.xlu0 %398
      %401 = vrot.lane.b32.xlu0 %v396, 32
      %v402 = vpop.permute.xlu0 %401
      %vm403 = vcmask 130048
      %v406 = vsel %vm403, %v355, %v399
      %vm407 = vcmask 261120
      %v409 = vsel %vm407, %v406, %v402
      %v410 = vld [vmem:[%s291] sm:$0xf]
      %v411 = vld [vmem:[%s291 + $0x4] sm:$0xf]
      %v412 = vld [vmem:[%s291 + $0x8] sm:$0xf]
      %v413 = vld [vmem:[%s291 + $0xc] sm:$0xf]
      %v414 = vld [vmem:[%s291 + $0x10] sm:$0xf]
      %v415 = vld [vmem:[%s291 + $0x14] sm:$0xf]
      %v416 = vld [vmem:[%s294] sm:$0x1]
      %v418 = vlaneseq
      %v419 = vshrl.u32 %v418, 7
      %v420 = vsub.s32 0, %v419
      %v421 = vrot.slane %v416, %v420
      %v429 = vunpack.c.l.b16 %v410
      %v430 = vunpack.c.l.b16 %v411
      %v431 = vunpack.c.l.b16 %v412
      %v432 = vunpack.c.l.b16 %v413
      %v433 = vunpack.c.l.b16 %v414
      %v434 = vunpack.c.l.b16 %v415
      %v435 = vpack.c.b16 %v430, %v429
      %v436 = vpack.c.b16 %v432, %v431
      %v437 = vpack.c.b16 %v434, %v433
      %vm441 = vcmask 392192
      %v442 = vsel %vm441, %v409, 0
      %444 = vmatprep.subr.bf16.mxu0 0
      %445 = vmatpush1.bf16.msra.mxu0 %v435
      %446 = vmatprep.subr.bf16.mxu0 0
      %447 = vmatpush1.bf16.msra.mxu0 %v436
      %448 = vmatprep.subr.bf16.mxu0 0
      %449 = vmatpush1.bf16.msra.mxu0 %v437
      %450 = vmatprep.subr.bf16.mxu0 0
      %451 = vmatpush1.bf16.msra.mxu0 0
      %452 = vmatprep.subr.bf16.mxu0 0
      %453 = vmatpush1.bf16.msra.mxu0 0
      %454 = vmatprep.subr.bf16.mxu0 0
      %455 = vmatpush1.bf16.msra.mxu0 0
      %456 = vmatprep.subr.bf16.mxu0 0
      %457 = vmatpush1.bf16.msra.mxu0 0
      %458 = vmatprep.subr.bf16.mxu0 0
      %459 = vmatpush1.bf16.msra.mxu0 0
      %460 = vmatprep.subr.bf16.mxu0 0
      %461 = vmatpush1.bf16.msra.mxu0 0
      %462 = vmatprep.subr.bf16.mxu0 0
      %463 = vmatpush1.bf16.msra.mxu0 0
      %464 = vmatprep.subr.bf16.mxu0 0
      %465 = vmatpush1.bf16.msra.mxu0 0
      %466 = vmatprep.subr.bf16.mxu0 0
      %467 = vmatpush1.bf16.msra.mxu0 0
      %468 = vmatprep.subr.bf16.mxu0 0
      %469 = vmatpush1.bf16.msra.mxu0 0
      %470 = vmatprep.subr.bf16.mxu0 0
      %471 = vmatpush1.bf16.msra.mxu0 0
      %472 = vmatprep.subr.bf16.mxu0 0
      %473 = vmatpush1.bf16.msra.mxu0 0
      %474 = vmatprep.subr.bf16.mxu0 0
      %475 = vmatpush1.bf16.msra.mxu0 0
      %476 = vmatprep.mubr.bf16.mxu0 0
      %477 = vmatmul.mubr.bf16.gmra.mrb[0].mxu0 %v442
      %v478 = vpop.f32.mrb[0].mxu0
      %v479 = vadd.f32 %v421, %v478
      %v480 = vpop.f32.mrb[0].mxu0
      %v481 = vpop.f32.mrb[0].mxu0
      %v482 = vadd.f32 %v421, %v481
      %v483 = vpop.f32.mrb[0].mxu0
      %484 = vdwg.mxu0
      %v485 = vxor.u32 %v479, 2147483648
      %v486 = vxor.u32 %v482, 2147483648
      %v487 = vmul.f32 %v485, 1.442695
      %v488 = vpow.pop %v487
      %v489 = vmul.f32 %v486, 1.442695
      %v490 = vpow.pop %v489
      %v491 = vadd.f32 %v488, 1.0
      %v492 = vadd.f32 %v490, 1.0
      %v493 = vrcp.pop %v491
      %v494 = vmul.f32 1.0, %v493
      %v495 = vrcp.pop %v492
      %v496 = vmul.f32 1.0, %v495
      %499 = vrot.lane.b32.xlu0 %v494, 112
      %v500 = vpop.permute.xlu0 %499
      %501 = vrot.lane.b32.xlu0 %v496, 112
      %v502 = vpop.permute.xlu0 %501
      %v505 = vmul.f32 %v479, %v500
      %v506 = vmul.f32 %v482, %v502
      %v507 = vpack.c.bf16 %v506, %v505
      %v508 = vld [vmem:[%s4] sm:$0xf]
      %v509 = vld [vmem:[%s4 + $0x4] sm:$0xf]
      %v510 = vld [vmem:[%s5] sm:$0x1]
      %v512 = vlaneseq
      %v513 = vshrl.u32 %v512, 7
      %v514 = vsub.s32 0, %v513
      %v515 = vrot.slane %v510, %v514
      %v519 = vunpack.c.l.b16 %v508
      %v520 = vunpack.c.l.b16 %v509
      %v521 = vpack.c.b16 %v520, %v519
      %v524 = vsel %vm403, %v507, 0
      %526 = vmatprep.subr.bf16.mxu0 0
      %527 = vmatpush1.bf16.msra.mxu0 %v521
      %528 = vmatprep.subr.bf16.mxu0 0
      %529 = vmatpush1.bf16.msra.mxu0 0
      %530 = vmatprep.subr.bf16.mxu0 0
      %531 = vmatpush1.bf16.msra.mxu0 0
      %532 = vmatprep.subr.bf16.mxu0 0
      %533 = vmatpush1.bf16.msra.mxu0 0
      %534 = vmatprep.subr.bf16.mxu0 0
      %535 = vmatpush1.bf16.msra.mxu0 0
      %536 = vmatprep.subr.bf16.mxu0 0
      %537 = vmatpush1.bf16.msra.mxu0 0
      %538 = vmatprep.subr.bf16.mxu0 0
      %539 = vmatpush1.bf16.msra.mxu0 0
      %540 = vmatprep.subr.bf16.mxu0 0
      %541 = vmatpush1.bf16.msra.mxu0 0
      %542 = vmatprep.subr.bf16.mxu0 0
      %543 = vmatpush1.bf16.msra.mxu0 0
      %544 = vmatprep.subr.bf16.mxu0 0
      %545 = vmatpush1.bf16.msra.mxu0 0
      %546 = vmatprep.subr.bf16.mxu0 0
      %547 = vmatpush1.bf16.msra.mxu0 0
      %548 = vmatprep.subr.bf16.mxu0 0
      %549 = vmatpush1.bf16.msra.mxu0 0
      %550 = vmatprep.subr.bf16.mxu0 0
      %551 = vmatpush1.bf16.msra.mxu0 0
      %552 = vmatprep.subr.bf16.mxu0 0
      %553 = vmatpush1.bf16.msra.mxu0 0
      %554 = vmatprep.subr.bf16.mxu0 0
      %555 = vmatpush1.bf16.msra.mxu0 0
      %556 = vmatprep.subr.bf16.mxu0 0
      %557 = vmatpush1.bf16.msra.mxu0 0
      %558 = vmatprep.mubr.bf16.mxu0 0
      %559 = vmatmul.mubr.bf16.gmra.mrb[0].mxu0 %v524
      %v560 = vpop.f32.mrb[0].mxu0
      %v561 = vadd.f32 %v515, %v560
      %v562 = vpop.f32.mrb[0].mxu0
      %v563 = vpop.f32.mrb[0].mxu0
      %v564 = vadd.f32 %v515, %v563
      %v565 = vpop.f32.mrb[0].mxu0
      %566 = vdwg.mxu0
      %v567 = vadd.f32 %v561, %v313
      %v568 = vadd.f32 %v564, %v314
      %569 = vst.msk [vmem:[%s299] sm:$0xff] %vm403, %v567
      %570 = vst.msk [vmem:[%s299 + $0x8] sm:$0xff] %vm403, %v568
      %s571 = smul.u32 2, %s21
      %p572 = scmp.lt.s32.totalorder %s571, 3
      %s573 = scalar_select %p572, %s571, 3
      %s574 = smul.addr %s573, 8
      %s575 = scalar_lea.vmem %s6, %s574
      // Predicated region
      $region49: #{tpu_custom_call.1} parent=43 // pred_check
        %p576 = pneg %p188
      $region50: #{tpu_custom_call.1} parent=43 // pred_check_branch
        %578 = sbr.rel (%p576) target = $region52
      $region51: #{tpu_custom_call.1} parent=43 // pred_region
        %s579 = smul.u32 2, %s21
      $region52: #{tpu_custom_call.1} parent=43 // pred_fallthru
        _
    $region44: #{tpu_custom_call.1} parent=5 // pred_fallthru
      _
    %p580 = scmp.le.s32.totalorder 2, %s12
    // Predicated region
    $region53: #{tpu_custom_call.1} parent=5 // pred_check
      %p581 = pneg %p580
    $region54: #{tpu_custom_call.1} parent=5 // pred_check_branch
      %583 = sbr.rel (%p581) target = $region56
    $region55: #{tpu_custom_call.1} parent=5 // pred_region
      %s584 = ssub.s32 %s12, 2
      // Predicated region
      $region57: #{tpu_custom_call.1} parent=55 // pred_check
        %p585 = pneg %p194
      $region58: #{tpu_custom_call.1} parent=55 // pred_check_branch
        %587 = sbr.rel (%p585) target = $region60
      $region59: #{tpu_custom_call.1} parent=55 // pred_region
        %s588 = smul.u32 2, %s23
        %p589 = scmp.lt.s32.totalorder %s588, 3
        %s590 = scalar_select %p589, %s588, 3
        %s591 = smul.addr %s590, 8
        %s592 = scalar_lea.vmem %s6, %s591
      $region60: #{tpu_custom_call.1} parent=55 // pred_fallthru
        _
    $region56: #{tpu_custom_call.1} parent=5 // pred_fallthru
      _
  $region6: #{tpu_custom_call.1} parent=0 // loop_footer
    %s16 = sadd.s32 1, %s12
  $region7: #{tpu_custom_call.1} parent=0 // loop_footer_branch
    %11 = sbr.rel target = $region3
  $region8: #{tpu_custom_call.1} parent=0 // loop_exit
    _

</llo_original>
